<compile_context>
chip_gen: v7x
topology: tpu7x:2x2x1
jax: 0.10.0
libtpu: 0.0.40
codegen_flags: <defaults>
</compile_context>

<pallas_src>
import jax
import jax.numpy as jnp
from jax.experimental import pallas as pl
from jax.experimental.pallas import tpu as pltpu


def _leaky(x, slope=0.01):
    return jnp.where(x > 0, x, slope * x)


# ---------------------------------------------------------------------------
# Kernel: one grid step == one batch element. All weights are VMEM-resident.
# ---------------------------------------------------------------------------
def _mm_kernel(sig_ref, clin_ref, convw_ref, fcw_ref, clinw_ref,
               w1s_ref, w1c_ref, w2_ref, bias_ref, out_ref):
    Lp, _ = sig_ref.shape           # (L+2, C_eeg + C_ecg), zero padded along L
    L = Lp - 2
    inv_L = 1.0 / float(L)

    # Packed biases: [conv(32) | fc(64) | clin(32) | bn-folded fc1(128) | fc2_pad(128)]
    conv_b = bias_ref[:, 0:32]
    fc_b = bias_ref[:, 32:96]
    clin_b = bias_ref[:, 96:128]
    b1 = bias_ref[:, 128:256]
    b2 = bias_ref[:, 256:384]

    # Signal is stored bf16 in HBM (halves the dominant stream); compute in f32.
    x = sig_ref[...].astype(jnp.float32)                       # (L+2, C_tot)

    # Fused EEG|ECG Conv1d(k=3, pad=1) as three shifted matmuls with a
    # block-diagonal weight -> (L, 32): cols 0:16 = EEG conv, 16:32 = ECG conv.
    h = jnp.dot(x[0:L], convw_ref[0], preferred_element_type=jnp.float32)
    h = h + jnp.dot(x[1:L + 1], convw_ref[1], preferred_element_type=jnp.float32)
    h = h + jnp.dot(x[2:L + 2], convw_ref[2], preferred_element_type=jnp.float32)
    h = _leaky(h + conv_b)                                      # (L, 32)

    # Global average pool over L (in-kernel reduction, no pooling matrix).
    pooled = jnp.sum(h, axis=0, keepdims=True) * inv_L          # (1, 32)

    # Fused block-diagonal Linear(16->32) for both encoders -> (1, 64).
    feat = _leaky(jnp.dot(pooled, fcw_ref[...],
                          preferred_element_type=jnp.float32) + fc_b)

    # Clinical branch: Linear -> Dropout(identity, eval) -> LeakyReLU.
    clin_f = _leaky(jnp.dot(clin_ref[...], clinw_ref[...],
                            preferred_element_type=jnp.float32) + clin_b)  # (1, 32)

    # fc_final1 (+ folded BatchNorm1d) without any feature concatenation:
    # z = [eeg|ecg]@W1[:64] + clin@W1[64:] + b1'.
    z = (jnp.dot(feat, w1s_ref[...], preferred_element_type=jnp.float32)
         + jnp.dot(clin_f, w1c_ref[...], preferred_element_type=jnp.float32)
         + b1)
    z = _leaky(z)                                               # (1, 128)

    # fc_final2 padded to 128 output lanes (only column 0 meaningful).
    logit = jnp.dot(z, w2_ref[...], preferred_element_type=jnp.float32) + b2

    # Numerically stable sigmoid.
    e = jnp.exp(-jnp.abs(logit))
    prob = jnp.where(logit >= 0, 1.0 / (1.0 + e), e / (1.0 + e))  # (1, 128)

    out_ref[...] = jnp.broadcast_to(prob, out_ref.shape)          # (8, 128)


# ---------------------------------------------------------------------------
# Parameter init (PyTorch-layout raw parameters).
# ---------------------------------------------------------------------------
def init_params(key, num_eeg_channels, num_ecg_channels, num_clinical_features):
    ks = jax.random.split(key, 7)
    return {
        "eeg_conv_w": jax.random.normal(ks[0], (16, num_eeg_channels, 3), jnp.float32) * 0.1,
        "eeg_conv_b": jnp.full((16,), 0.01, jnp.float32),
        "eeg_fc_w":   jax.random.normal(ks[1], (32, 16), jnp.float32) * 0.1,
        "eeg_fc_b":   jnp.full((32,), 0.01, jnp.float32),
        "ecg_conv_w": jax.random.normal(ks[2], (16, num_ecg_channels, 3), jnp.float32) * 0.1,
        "ecg_conv_b": jnp.full((16,), 0.01, jnp.float32),
        "ecg_fc_w":   jax.random.normal(ks[3], (32, 16), jnp.float32) * 0.1,
        "ecg_fc_b":   jnp.full((32,), 0.01, jnp.float32),
        "clin_w":     jax.random.normal(ks[4], (32, num_clinical_features), jnp.float32) * 0.1,
        "clin_b":     jnp.full((32,), 0.01, jnp.float32),
        "f1_w":       jax.random.normal(ks[5], (128, 96), jnp.float32) * 0.1,
        "f1_b":       jnp.full((128,), 0.01, jnp.float32),
        "bn_g":       jnp.ones((128,), jnp.float32),
        "bn_b":       jnp.zeros((128,), jnp.float32),
        "bn_m":       jnp.zeros((128,), jnp.float32),
        "bn_v":       jnp.ones((128,), jnp.float32),
        "f2_w":       jax.random.normal(ks[6], (1, 128), jnp.float32) * 0.1,
        "f2_b":       jnp.full((1,), 0.01, jnp.float32),
    }


# ---------------------------------------------------------------------------
# Trace-time weight fusion / BN folding / bias packing.
# ---------------------------------------------------------------------------
def _prepare_weights(params, c_eeg, c_ecg, signal_dtype):
    c_tot = c_eeg + c_ecg

    # Per-offset block-diagonal conv weights: (3, C_tot, 32).
    conv_w = jnp.zeros((3, c_tot, 32), jnp.float32)
    for k in range(3):
        conv_w = conv_w.at[k, :c_eeg, :16].set(params["eeg_conv_w"][:, :, k].T)
        conv_w = conv_w.at[k, c_eeg:, 16:].set(params["ecg_conv_w"][:, :, k].T)
    conv_w = conv_w.astype(signal_dtype)

    # Fused block-diagonal encoder FC: (32, 64).
    fc_w = jnp.zeros((32, 64), jnp.float32)
    fc_w = fc_w.at[:16, :32].set(params["eeg_fc_w"].T)
    fc_w = fc_w.at[16:, 32:].set(params["ecg_fc_w"].T)

    clin_w = params["clin_w"].T                                  # (F, 32)

    # Fold eval-mode BatchNorm1d into fc_final1.
    scale = params["bn_g"] * jax.lax.rsqrt(params["bn_v"] + 1e-5)       # (128,)
    w1 = params["f1_w"].T * scale[None, :]                              # (96, 128)
    b1 = (params["f1_b"] - params["bn_m"]) * scale + params["bn_b"]     # (128,)
    w1_sig, w1_clin = w1[:64], w1[64:]                                  # (64,128),(32,128)

    # fc_final2 padded to 128 lanes (lane-dense final matmul / store).
    w2 = jnp.zeros((128, 128), jnp.float32).at[:, 0].set(params["f2_w"][0])
    b2 = jnp.zeros((128,), jnp.float32).at[0].set(params["f2_b"][0])

    bias = jnp.concatenate([
        params["eeg_conv_b"], params["ecg_conv_b"],   # conv  : [  0: 32]
        params["eeg_fc_b"], params["ecg_fc_b"],       # fc    : [ 32: 96]
        params["clin_b"],                             # clin  : [ 96:128]
        b1,                                           # fc1'  : [128:256]
        b2,                                           # fc2   : [256:384]
    ])[None, :]                                       # (1, 384)

    return conv_w, fc_w, clin_w, w1_sig, w1_clin, w2, bias


# ---------------------------------------------------------------------------
# Wrapper.
# ---------------------------------------------------------------------------
def multimodal_classifier(eeg, ecg, clin, params, *, signal_dtype=jnp.bfloat16):
    B, c_eeg, L = eeg.shape
    _, c_ecg, _ = ecg.shape
    F = clin.shape[1]
    c_tot = c_eeg + c_ecg
    Lp = L + 2

    # Channel-last, channel-concatenated, L-zero-padded signal stream (bf16).
    sig = jnp.concatenate(
        [eeg.transpose(0, 2, 1), ecg.transpose(0, 2, 1)], axis=-1)       # (B, L, C_tot)
    sig = jnp.pad(sig, ((0, 0), (1, 1), (0, 0))).astype(signal_dtype)    # (B, L+2, C_tot)

    clin3 = clin.astype(jnp.float32).reshape(B, 1, F)                    # (B, 1, F)

    conv_w, fc_w, clin_w, w1s, w1c, w2, bias = _prepare_weights(
        params, c_eeg, c_ecg, signal_dtype)

    out = pl.pallas_call(
        _mm_kernel,
        out_shape=jax.ShapeDtypeStruct((B, 8, 128), jnp.float32),
        grid_spec=pltpu.PrefetchScalarGridSpec(
            num_scalar_prefetch=0,
            grid=(B,),
            in_specs=[
                pl.BlockSpec((None, Lp, c_tot), lambda b: (b, 0, 0)),   # signal
                pl.BlockSpec((None, 1, F), lambda b: (b, 0, 0)),        # clinical row
                pl.BlockSpec((3, c_tot, 32), lambda b: (0, 0, 0)),      # fused conv W
                pl.BlockSpec((32, 64), lambda b: (0, 0)),               # fused enc FC
                pl.BlockSpec((F, 32), lambda b: (0, 0)),                # clinical FC
                pl.BlockSpec((64, 128), lambda b: (0, 0)),              # fc1 (sig rows)
                pl.BlockSpec((32, 128), lambda b: (0, 0)),              # fc1 (clin rows)
                pl.BlockSpec((128, 128), lambda b: (0, 0)),             # fc2 (padded)
                pl.BlockSpec((1, 384), lambda b: (0, 0)),               # packed biases
            ],
            out_specs=pl.BlockSpec((None, 8, 128), lambda b: (b, 0, 0)),
        ),
        compiler_params=pltpu.CompilerParams(
            dimension_semantics=("parallel",),
            vmem_limit_bytes=48 * 1024 * 1024,
        ),
    )(sig, clin3, conv_w, fc_w, clin_w, w1s, w1c, w2, bias)

    return out[:, 0, :1]                                                # (B, 1)


# ---------------------------------------------------------------------------
# Pure-JAX reference (eval-mode semantics) for a correctness check.
# ---------------------------------------------------------------------------
def _reference_forward(eeg, ecg, clin, params, signal_dtype):
    def leaky(x):
        return jnp.where(x > 0, x, 0.01 * x)

    def encoder(x, cw, cb, fw, fb):
        x = x.astype(signal_dtype).astype(jnp.float32)          # same rounding as kernel
        B, C, L = x.shape
        xp = jnp.pad(x, ((0, 0), (0, 0), (1, 1)))
        y = jnp.zeros((B, 16, L), jnp.float32)
        for k in range(3):
            y = y + jnp.einsum('bcl,oc->bol', xp[:, :, k:k + L], cw[:, :, k])
        y = leaky(y + cb[None, :, None])
        pooled = y.mean(axis=2)                                 # (B, 16)
        return leaky(pooled @ fw.T + fb)

    eeg_f = encoder(eeg, params["eeg_conv_w"], params["eeg_conv_b"],
                    params["eeg_fc_w"], params["eeg_fc_b"])
    ecg_f = encoder(ecg, params["ecg_conv_w"], params["ecg_conv_b"],
                    params["ecg_fc_w"], params["ecg_fc_b"])
    clin_f = leaky(clin @ params["clin_w"].T + params["clin_b"])
    cat = jnp.concatenate([eeg_f, ecg_f, clin_f], axis=1)
    z = cat @ params["f1_w"].T + params["f1_b"]
    scale = params["bn_g"] / jnp.sqrt(params["bn_v"] + 1e-5)
    z = leaky((z - params["bn_m"]) * scale + params["bn_b"])
    return jax.nn.sigmoid(z @ params["f2_w"].T + params["f2_b"])


if __name__ == "__main__":
    B, C_EEG, C_ECG, L, F_CLIN = 4, 4, 2, 16, 8

    key = jax.random.PRNGKey(0)
    k_eeg, k_ecg, k_clin = jax.random.split(key, 3)
    eeg_input = jax.random.normal(k_eeg, (B, C_EEG, L), jnp.float32)       # NCL
    ecg_input = jax.random.normal(k_ecg, (B, C_ECG, L), jnp.float32)       # NCL
    clinical_input = jax.random.normal(k_clin, (B, F_CLIN), jnp.float32)

    params = init_params(jax.random.PRNGKey(42), C_EEG, C_ECG, F_CLIN)

    out = multimodal_classifier(eeg_input, ecg_input, clinical_input, params)
    out = jax.block_until_ready(out)

    ref = _reference_forward(eeg_input, ecg_input, clinical_input, params,
                             jnp.bfloat16)

    assert out.shape == (B, 1)
    assert bool(jnp.all((out > 0.0) & (out < 1.0)))
    assert bool(jnp.allclose(out, ref, atol=5e-3, rtol=5e-3))
    print("KERNEL_OK")
</pallas_src>

<mosaic_0001>
module attributes {stable_mosaic.version = 11 : i64} {
  func.func @_mm_kernel(%arg0: i32, %arg1: memref<1x18x6xbf16, #tpu.memory_space<vmem>>, %arg2: memref<1x1x8xf32, #tpu.memory_space<vmem>>, %arg3: memref<3x6x32xbf16, #tpu.memory_space<vmem>>, %arg4: memref<32x64xf32, #tpu.memory_space<vmem>>, %arg5: memref<8x32xf32, #tpu.memory_space<vmem>>, %arg6: memref<64x128xf32, #tpu.memory_space<vmem>>, %arg7: memref<32x128xf32, #tpu.memory_space<vmem>>, %arg8: memref<128x128xf32, #tpu.memory_space<vmem>>, %arg9: memref<1x384xf32, #tpu.memory_space<vmem>>, %arg10: memref<1x8x128xf32, #tpu.memory_space<vmem>>) attributes {dimension_semantics = [#tpu.dimension_semantics<parallel>], iteration_bounds = array<i64: 4>, scalar_prefetch = 0 : i64, scratch_operands = 0 : i64, tpu.core_type = #tpu.core_type<tc>, window_params = [{transform_indices = @transform_0, window_bounds = array<i64: 1, 18, 6>}, {transform_indices = @transform_1, window_bounds = array<i64: 1, 1, 8>}, {pipeline_mode = #tpu.pipeline_mode<synchronous>, transform_indices = @transform_2, window_bounds = array<i64: 3, 6, 32>}, {pipeline_mode = #tpu.pipeline_mode<synchronous>, transform_indices = @transform_3, window_bounds = array<i64: 32, 64>}, {pipeline_mode = #tpu.pipeline_mode<synchronous>, transform_indices = @transform_4, window_bounds = array<i64: 8, 32>}, {pipeline_mode = #tpu.pipeline_mode<synchronous>, transform_indices = @transform_5, window_bounds = array<i64: 64, 128>}, {pipeline_mode = #tpu.pipeline_mode<synchronous>, transform_indices = @transform_6, window_bounds = array<i64: 32, 128>}, {pipeline_mode = #tpu.pipeline_mode<synchronous>, transform_indices = @transform_7, window_bounds = array<i64: 128, 128>}, {pipeline_mode = #tpu.pipeline_mode<synchronous>, transform_indices = @transform_8, window_bounds = array<i64: 1, 384>}, {transform_indices = @transform_9, window_bounds = array<i64: 1, 8, 128>}]} {
    %c0 = arith.constant 0 : index
    %c0_0 = arith.constant 0 : index
    %0 = vector.load %arg9[%c0, %c0_0] : memref<1x384xf32, #tpu.memory_space<vmem>>, vector<1x32xf32>
    %c0_1 = arith.constant 0 : index
    %c32 = arith.constant 32 : index
    %1 = vector.load %arg9[%c0_1, %c32] : memref<1x384xf32, #tpu.memory_space<vmem>>, vector<1x64xf32>
    %c0_2 = arith.constant 0 : index
    %c96 = arith.constant 96 : index
    %2 = vector.load %arg9[%c0_2, %c96] : memref<1x384xf32, #tpu.memory_space<vmem>>, vector<1x32xf32>
    %c0_3 = arith.constant 0 : index
    %c128 = arith.constant 128 : index
    %3 = vector.load %arg9[%c0_3, %c128] : memref<1x384xf32, #tpu.memory_space<vmem>>, vector<1x128xf32>
    %c0_4 = arith.constant 0 : index
    %c256 = arith.constant 256 : index
    %4 = vector.load %arg9[%c0_4, %c256] : memref<1x384xf32, #tpu.memory_space<vmem>>, vector<1x128xf32>
    %c0_5 = arith.constant 0 : index
    %c0_6 = arith.constant 0 : index
    %c0_7 = arith.constant 0 : index
    %5 = vector.load %arg1[%c0_5, %c0_6, %c0_7] : memref<1x18x6xbf16, #tpu.memory_space<vmem>>, vector<1x18x6xbf16>
    %6 = vector.shape_cast %5 : vector<1x18x6xbf16> to vector<18x6xbf16>
    %7 = arith.extf %6 : vector<18x6xbf16> to vector<18x6xf32>
    %8 = vector.extract_strided_slice %7 {offsets = [0, 0], sizes = [16, 6], strides = [1, 1]} : vector<18x6xf32> to vector<16x6xf32>
    %c0_8 = arith.constant 0 : index
    %c0_9 = arith.constant 0 : index
    %c0_10 = arith.constant 0 : index
    %9 = vector.load %arg3[%c0_8, %c0_9, %c0_10] : memref<3x6x32xbf16, #tpu.memory_space<vmem>>, vector<1x6x32xbf16>
    %10 = vector.shape_cast %9 : vector<1x6x32xbf16> to vector<6x32xbf16>
    %cst = arith.constant dense<0.000000e+00> : vector<16x32xf32>
    %11 = tpu.matmul %8, %10, %cst {dimension_numbers = #tpu.dot_dimension_numbers<[1], [0], [0], [1], [0, 0, 1, 1], [], []>} : vector<16x6xf32>, vector<6x32xbf16>, vector<16x32xf32> -> vector<16x32xf32>
    %12 = vector.extract_strided_slice %7 {offsets = [1, 0], sizes = [16, 6], strides = [1, 1]} : vector<18x6xf32> to vector<16x6xf32>
    %c1 = arith.constant 1 : index
    %c0_11 = arith.constant 0 : index
    %c0_12 = arith.constant 0 : index
    %13 = vector.load %arg3[%c1, %c0_11, %c0_12] : memref<3x6x32xbf16, #tpu.memory_space<vmem>>, vector<1x6x32xbf16>
    %14 = vector.shape_cast %13 : vector<1x6x32xbf16> to vector<6x32xbf16>
    %cst_13 = arith.constant dense<0.000000e+00> : vector<16x32xf32>
    %15 = tpu.matmul %12, %14, %cst_13 {dimension_numbers = #tpu.dot_dimension_numbers<[1], [0], [0], [1], [0, 0, 1, 1], [], []>} : vector<16x6xf32>, vector<6x32xbf16>, vector<16x32xf32> -> vector<16x32xf32>
    %16 = arith.addf %11, %15 : vector<16x32xf32>
    %17 = vector.extract_strided_slice %7 {offsets = [2, 0], sizes = [16, 6], strides = [1, 1]} : vector<18x6xf32> to vector<16x6xf32>
    %c2 = arith.constant 2 : index
    %c0_14 = arith.constant 0 : index
    %c0_15 = arith.constant 0 : index
    %18 = vector.load %arg3[%c2, %c0_14, %c0_15] : memref<3x6x32xbf16, #tpu.memory_space<vmem>>, vector<1x6x32xbf16>
    %19 = vector.shape_cast %18 : vector<1x6x32xbf16> to vector<6x32xbf16>
    %cst_16 = arith.constant dense<0.000000e+00> : vector<16x32xf32>
    %20 = tpu.matmul %17, %19, %cst_16 {dimension_numbers = #tpu.dot_dimension_numbers<[1], [0], [0], [1], [0, 0, 1, 1], [], []>} : vector<16x6xf32>, vector<6x32xbf16>, vector<16x32xf32> -> vector<16x32xf32>
    %21 = arith.addf %16, %20 : vector<16x32xf32>
    %22 = vector.broadcast %0 : vector<1x32xf32> to vector<16x32xf32>
    %23 = arith.addf %21, %22 : vector<16x32xf32>
    %cst_17 = arith.constant 0.000000e+00 : f32
    %24 = vector.broadcast %cst_17 : f32 to vector<16x32xf32>
    %25 = arith.cmpf ogt, %23, %24 : vector<16x32xf32>
    %cst_18 = arith.constant 0.00999999977 : f32
    %26 = vector.broadcast %cst_18 : f32 to vector<16x32xf32>
    %27 = arith.mulf %26, %23 : vector<16x32xf32>
    %28 = arith.select %25, %23, %27 : vector<16x32xi1>, vector<16x32xf32>
    %cst_19 = arith.constant dense<0.000000e+00> : vector<32xf32>
    %29 = vector.multi_reduction <add>, %28, %cst_19 [0] : vector<16x32xf32> to vector<32xf32>
    %30 = vector.shape_cast %29 : vector<32xf32> to vector<1x32xf32>
    %cst_20 = arith.constant 6.250000e-02 : f32
    %31 = vector.broadcast %cst_20 : f32 to vector<1x32xf32>
    %32 = arith.mulf %30, %31 : vector<1x32xf32>
    %c0_21 = arith.constant 0 : index
    %c0_22 = arith.constant 0 : index
    %33 = vector.load %arg4[%c0_21, %c0_22] : memref<32x64xf32, #tpu.memory_space<vmem>>, vector<32x64xf32>
    %cst_23 = arith.constant dense<0.000000e+00> : vector<1x64xf32>
    %34 = tpu.matmul %32, %33, %cst_23 {dimension_numbers = #tpu.dot_dimension_numbers<[1], [0], [0], [1], [0, 0, 1, 1], [], []>} : vector<1x32xf32>, vector<32x64xf32>, vector<1x64xf32> -> vector<1x64xf32>
    %35 = arith.addf %34, %1 : vector<1x64xf32>
    %cst_24 = arith.constant 0.000000e+00 : f32
    %36 = vector.broadcast %cst_24 : f32 to vector<1x64xf32>
    %37 = arith.cmpf ogt, %35, %36 : vector<1x64xf32>
    %cst_25 = arith.constant 0.00999999977 : f32
    %38 = vector.broadcast %cst_25 : f32 to vector<1x64xf32>
    %39 = arith.mulf %38, %35 : vector<1x64xf32>
    %40 = arith.select %37, %35, %39 : vector<1x64xi1>, vector<1x64xf32>
    %c0_26 = arith.constant 0 : index
    %c0_27 = arith.constant 0 : index
    %c0_28 = arith.constant 0 : index
    %41 = vector.load %arg2[%c0_26, %c0_27, %c0_28] : memref<1x1x8xf32, #tpu.memory_space<vmem>>, vector<1x1x8xf32>
    %42 = vector.shape_cast %41 : vector<1x1x8xf32> to vector<1x8xf32>
    %c0_29 = arith.constant 0 : index
    %c0_30 = arith.constant 0 : index
    %43 = vector.load %arg5[%c0_29, %c0_30] : memref<8x32xf32, #tpu.memory_space<vmem>>, vector<8x32xf32>
    %cst_31 = arith.constant dense<0.000000e+00> : vector<1x32xf32>
    %44 = tpu.matmul %42, %43, %cst_31 {dimension_numbers = #tpu.dot_dimension_numbers<[1], [0], [0], [1], [0, 0, 1, 1], [], []>} : vector<1x8xf32>, vector<8x32xf32>, vector<1x32xf32> -> vector<1x32xf32>
    %45 = arith.addf %44, %2 : vector<1x32xf32>
    %cst_32 = arith.constant 0.000000e+00 : f32
    %46 = vector.broadcast %cst_32 : f32 to vector<1x32xf32>
    %47 = arith.cmpf ogt, %45, %46 : vector<1x32xf32>
    %cst_33 = arith.constant 0.00999999977 : f32
    %48 = vector.broadcast %cst_33 : f32 to vector<1x32xf32>
    %49 = arith.mulf %48, %45 : vector<1x32xf32>
    %50 = arith.select %47, %45, %49 : vector<1x32xi1>, vector<1x32xf32>
    %c0_34 = arith.constant 0 : index
    %c0_35 = arith.constant 0 : index
    %51 = vector.load %arg6[%c0_34, %c0_35] : memref<64x128xf32, #tpu.memory_space<vmem>>, vector<64x128xf32>
    %cst_36 = arith.constant dense<0.000000e+00> : vector<1x128xf32>
    %52 = tpu.matmul %40, %51, %cst_36 {dimension_numbers = #tpu.dot_dimension_numbers<[1], [0], [0], [1], [0, 0, 1, 1], [], []>} : vector<1x64xf32>, vector<64x128xf32>, vector<1x128xf32> -> vector<1x128xf32>
    %c0_37 = arith.constant 0 : index
    %c0_38 = arith.constant 0 : index
    %53 = vector.load %arg7[%c0_37, %c0_38] : memref<32x128xf32, #tpu.memory_space<vmem>>, vector<32x128xf32>
    %cst_39 = arith.constant dense<0.000000e+00> : vector<1x128xf32>
    %54 = tpu.matmul %50, %53, %cst_39 {dimension_numbers = #tpu.dot_dimension_numbers<[1], [0], [0], [1], [0, 0, 1, 1], [], []>} : vector<1x32xf32>, vector<32x128xf32>, vector<1x128xf32> -> vector<1x128xf32>
    %55 = arith.addf %52, %54 : vector<1x128xf32>
    %56 = arith.addf %55, %3 : vector<1x128xf32>
    %cst_40 = arith.constant 0.000000e+00 : f32
    %57 = vector.broadcast %cst_40 : f32 to vector<1x128xf32>
    %58 = arith.cmpf ogt, %56, %57 : vector<1x128xf32>
    %cst_41 = arith.constant 0.00999999977 : f32
    %59 = vector.broadcast %cst_41 : f32 to vector<1x128xf32>
    %60 = arith.mulf %59, %56 : vector<1x128xf32>
    %61 = arith.select %58, %56, %60 : vector<1x128xi1>, vector<1x128xf32>
    %c0_42 = arith.constant 0 : index
    %c0_43 = arith.constant 0 : index
    %62 = vector.load %arg8[%c0_42, %c0_43] : memref<128x128xf32, #tpu.memory_space<vmem>>, vector<128x128xf32>
    %cst_44 = arith.constant dense<0.000000e+00> : vector<1x128xf32>
    %63 = tpu.matmul %61, %62, %cst_44 {dimension_numbers = #tpu.dot_dimension_numbers<[1], [0], [0], [1], [0, 0, 1, 1], [], []>} : vector<1x128xf32>, vector<128x128xf32>, vector<1x128xf32> -> vector<1x128xf32>
    %64 = arith.addf %63, %4 : vector<1x128xf32>
    %65 = math.absf %64 : vector<1x128xf32>
    %cst_45 = arith.constant 0.000000e+00 : f32
    %66 = vector.broadcast %cst_45 : f32 to vector<1x128xf32>
    %67 = arith.subf %66, %65 : vector<1x128xf32>
    %68 = math.exp %67 : vector<1x128xf32>
    %cst_46 = arith.constant 0.000000e+00 : f32
    %69 = vector.broadcast %cst_46 : f32 to vector<1x128xf32>
    %70 = arith.cmpf oge, %64, %69 : vector<1x128xf32>
    %cst_47 = arith.constant 1.000000e+00 : f32
    %71 = vector.broadcast %cst_47 : f32 to vector<1x128xf32>
    %72 = arith.addf %71, %68 : vector<1x128xf32>
    %cst_48 = arith.constant 1.000000e+00 : f32
    %73 = vector.broadcast %cst_48 : f32 to vector<1x128xf32>
    %74 = arith.divf %73, %72 : vector<1x128xf32>
    %cst_49 = arith.constant 1.000000e+00 : f32
    %75 = vector.broadcast %cst_49 : f32 to vector<1x128xf32>
    %76 = arith.addf %75, %68 : vector<1x128xf32>
    %77 = arith.divf %68, %76 : vector<1x128xf32>
    %78 = arith.select %70, %74, %77 : vector<1x128xi1>, vector<1x128xf32>
    %79 = vector.shape_cast %78 : vector<1x128xf32> to vector<1x128xf32>
    %80 = vector.broadcast %79 : vector<1x128xf32> to vector<8x128xf32>
    %c0_50 = arith.constant 0 : index
    %c0_51 = arith.constant 0 : index
    %c0_52 = arith.constant 0 : index
    %81 = vector.load %arg10[%c0_50, %c0_51, %c0_52] : memref<1x8x128xf32, #tpu.memory_space<vmem>>, vector<1x8x128xf32>
    %82 = vector.shape_cast %81 : vector<1x8x128xf32> to vector<8x128xf32>
    %83 = vector.shape_cast %80 : vector<8x128xf32> to vector<1x8x128xf32>
    tpu.vector_store %arg10[%c0_50, %c0_51, %c0_52], %83 {strides = array<i32>} : memref<1x8x128xf32, #tpu.memory_space<vmem>>, vector<1x8x128xf32>,
    return
  }
  func.func @transform_0(%arg0: i32) -> (i32, i32, i32) {
    %c0_i32 = arith.constant 0 : i32
    %c0_i32_0 = arith.constant 0 : i32
    %c0_i32_1 = arith.constant 0 : i32
    return %arg0, %c0_i32, %c0_i32_0 : i32, i32, i32
  }
  func.func @transform_1(%arg0: i32) -> (i32, i32, i32) {
    %c0_i32 = arith.constant 0 : i32
    %c0_i32_0 = arith.constant 0 : i32
    %c0_i32_1 = arith.constant 0 : i32
    return %arg0, %c0_i32, %c0_i32_0 : i32, i32, i32
  }
  func.func @transform_2(%arg0: i32) -> (i32, i32, i32) {
    %c0_i32 = arith.constant 0 : i32
    %c0_i32_0 = arith.constant 0 : i32
    %c0_i32_1 = arith.constant 0 : i32
    %c0_i32_2 = arith.constant 0 : i32
    return %c0_i32, %c0_i32_0, %c0_i32_1 : i32, i32, i32
  }
  func.func @transform_3(%arg0: i32) -> (i32, i32) {
    %c0_i32 = arith.constant 0 : i32
    %c0_i32_0 = arith.constant 0 : i32
    %c0_i32_1 = arith.constant 0 : i32
    return %c0_i32, %c0_i32_0 : i32, i32
  }
  func.func @transform_4(%arg0: i32) -> (i32, i32) {
    %c0_i32 = arith.constant 0 : i32
    %c0_i32_0 = arith.constant 0 : i32
    %c0_i32_1 = arith.constant 0 : i32
    return %c0_i32, %c0_i32_0 : i32, i32
  }
  func.func @transform_5(%arg0: i32) -> (i32, i32) {
    %c0_i32 = arith.constant 0 : i32
    %c0_i32_0 = arith.constant 0 : i32
    %c0_i32_1 = arith.constant 0 : i32
    return %c0_i32, %c0_i32_0 : i32, i32
  }
  func.func @transform_6(%arg0: i32) -> (i32, i32) {
    %c0_i32 = arith.constant 0 : i32
    %c0_i32_0 = arith.constant 0 : i32
    %c0_i32_1 = arith.constant 0 : i32
    return %c0_i32, %c0_i32_0 : i32, i32
  }
  func.func @transform_7(%arg0: i32) -> (i32, i32) {
    %c0_i32 = arith.constant 0 : i32
    %c0_i32_0 = arith.constant 0 : i32
    %c0_i32_1 = arith.constant 0 : i32
    return %c0_i32, %c0_i32_0 : i32, i32
  }
  func.func @transform_8(%arg0: i32) -> (i32, i32) {
    %c0_i32 = arith.constant 0 : i32
    %c0_i32_0 = arith.constant 0 : i32
    %c0_i32_1 = arith.constant 0 : i32
    return %c0_i32, %c0_i32_0 : i32, i32
  }
  func.func @transform_9(%arg0: i32) -> (i32, i32, i32) {
    %c0_i32 = arith.constant 0 : i32
    %c0_i32_0 = arith.constant 0 : i32
    %c0_i32_1 = arith.constant 0 : i32
    return %arg0, %c0_i32, %c0_i32_0 : i32, i32, i32
  }
}

</mosaic_0001>

<llo_original>
// kernel: tpu_custom_call.1
$region0: #{tpu_custom_call.1}
  #allocation0 [shape = 'u32[]', space=smem, size = 0x4, offset = 0x4, fixed_abs, tag = 'smem constant byte address 0x4 - core index']
  #allocation1 [shape = 'u32[144,128]{1,0:T(1,128)}', space=vmem, size = 0x12000, scoped, tag = 'internal scratch']
  %s0 = inlined_call_operand.vmem [shape: bf16[4,18,6], index: 0, kind: input, shape index: {}]
  %s1 = inlined_call_operand.hbm [shape: f32[4,1,8], index: 1, kind: input, shape index: {}]
  %s2 = inlined_call_operand.vmem [shape: bf16[3,6,32], index: 2, kind: input, shape index: {}]
  %s3 = inlined_call_operand.hbm [shape: f32[32,64], index: 3, kind: input, shape index: {}]
  %s4 = inlined_call_operand.hbm [shape: f32[8,32], index: 4, kind: input, shape index: {}]
  %s5 = inlined_call_operand.vmem [shape: f32[64,128], index: 5, kind: input, shape index: {}]
  %s6 = inlined_call_operand.hbm [shape: f32[32,128], index: 6, kind: input, shape index: {}]
  %s7 = inlined_call_operand.hbm [shape: f32[128,128], index: 7, kind: input, shape index: {}]
  %s8 = inlined_call_operand.vmem [shape: f32[1,384], index: 8, kind: input, shape index: {}]
  %s9 = inlined_call_operand.hbm [shape: f32[4,8,128], index: 9, kind: output, shape index: {}]
  %s10 = sld [smem:[#allocation0]]
  $region89: #{tpu_custom_call.1} parent=0
    _
  %s12 = ssub.s32 1, %s10
  %s13 = scalar_select 0, %s12, %s10
  $region1: #{tpu_custom_call.1} parent=0
    #allocation2 [shape = 'u8[1024]{0}', space=vmem, size = 0x400, scoped, tag = 'input window, operand 1']
    #allocation3 [shape = 's32[2]{0}', space=sflag, size = 0x8, scoped, tag = 'scoped memory for tpu_custom_call.1']
    #allocation4 [shape = 's32[2]{0}', space=sflag, size = 0x8, scoped, tag = 'scoped memory for tpu_custom_call.1']
    #allocation5 [shape = 'u8[16384]{0}', space=vmem, size = 0x4000, scoped, tag = 'input window, operand 3, single buffered']
    #allocation6 [shape = 's32[1]{0}', space=sflag, size = 0x4, scoped, tag = 'scoped memory for tpu_custom_call.1']
    #allocation7 [shape = 'u8[4096]{0}', space=vmem, size = 0x1000, scoped, tag = 'input window, operand 4, single buffered']
    #allocation8 [shape = 'u8[16384]{0}', space=vmem, size = 0x4000, scoped, tag = 'input window, operand 6, single buffered']
    #allocation9 [shape = 's32[1]{0}', space=sflag, size = 0x4, scoped, tag = 'scoped memory for tpu_custom_call.1']
    #allocation10 [shape = 'u8[65536]{0}', space=vmem, size = 0x10000, scoped, tag = 'input window, operand 7, single buffered']
    #allocation11 [shape = 'u8[8192]{0}', space=vmem, size = 0x2000, scoped, tag = 'output window, operand 0']
    %14 = vsyncpa [#allocation3], 0
    %s15 = scalar_lea.sflag [#allocation3], 1
    %16 = vsyncpa %s15, 0
    %17 = vsyncpa [#allocation6], 0
    %18 = vsyncpa [#allocation9], 0
    %19 = vsyncpa [#allocation4], 0
    %s20 = scalar_lea.sflag [#allocation4], 1
    %21 = vsyncpa %s20, 0
    loop: start=0, step=1, limit=6
    $region2: #{tpu_custom_call.1} parent=1 // loop_pre_header
      _
    $region3: #{tpu_custom_call.1} parent=1 // loop_header
      %s23 = sphi 0, %s27
      %p24 = scmp.ge.s32.totalorder %s23, 6
      %s33 = sphi 0, %s35
      %s36 = sphi 0, %s33
      %s37 = sphi 0, %s36
      %s53 = sphi 0, %s37
      %s59 = sphi 0, %s61
      %s62 = sphi 0, %s59
      %s63 = sphi 0, %s62
      %s79 = sphi 0, %s63
      %s83 = sphi 0, %s83
      %s85 = sphi 0, %s83
      %s86 = sphi 0, %s85
      %s100 = sphi 0, %s86
      %s104 = sphi 0, %s104
      %s106 = sphi 0, %s104
      %s107 = sphi 0, %s106
      %s121 = sphi 0, %s107
      %s125 = sphi 0, %s125
      %s127 = sphi 0, %s125
      %s128 = sphi 0, %s127
      %s142 = sphi 0, %s128
      %s146 = sphi 0, %s146
      %s148 = sphi 0, %s146
      %s149 = sphi 0, %s148
      %s163 = sphi 0, %s149
      %s167 = sphi 0, %s167
      %s169 = sphi 0, %s167
      %s170 = sphi 0, %s169
      %s184 = sphi 0, %s170
      %s188 = sphi 0, %s188
      %s190 = sphi 0, %s188
      %s191 = sphi 0, %s190
      %s205 = sphi 0, %s191
      %s209 = sphi 0, %s209
      %s211 = sphi 0, %s209
      %s212 = sphi 0, %s211
      %s226 = sphi 0, %s212
      %s232 = sphi 0, %s234
      %s235 = sphi 0, %s232
      %s236 = sphi 0, %s235
      %s252 = sphi 0, %s236
    $region4: #{tpu_custom_call.1} parent=1 // loop_header_branch
      %26 = sbr.rel (%p24) target = $region8
    $region5: #{tpu_custom_call.1} parent=1 // loop_body
      %s28 = ssub.s32 %s23, 1
      %s29 = ssub.s32 %s23, 2
      %s30 = sadd.s32 %s23, 1
      %s31 = ssub.s32 %s23, %s30
      %p32 = scmp.eq.s32.totalorder %s31, 0
      %s34 = sadd.s32 %s33, 1
      %s35 = scalar_select %p32, %s33, %s34
      %p38 = pneg %p32
      %p39 = scmp.eq.s32.totalorder %s23, 3
      %p40 = por %p38, %p39
      %p41 = scmp.ne.s32.totalorder %s33, %s36
      %p42 = scmp.eq.s32.totalorder %s23, 0
      %p43 = por %p41, %p42
      %p44 = scmp.ne.s32.totalorder %s33, %s36
      %p45 = scmp.eq.s32.totalorder %s28, 3
      %p46 = por %p44, %p45
      %p47 = scmp.ne.s32.totalorder %s36, %s37
      %p48 = scmp.eq.s32.totalorder %s28, 0
      %p49 = por %p47, %p48
      %p50 = scmp.ne.s32.totalorder %s36, %s37
      %p51 = scmp.eq.s32.totalorder %s29, 3
      %p52 = por %p50, %p51
      %p54 = scmp.ne.s32.totalorder %s37, %s53
      %p55 = scmp.eq.s32.totalorder %s29, 0
      %p56 = por %p54, %p55
      %s57 = ssub.s32 %s23, %s30
      %p58 = scmp.eq.s32.totalorder %s57, 0
      %s60 = sadd.s32 %s59, 1
      %s61 = scalar_select %p58, %s59, %s60
      %p64 = pneg %p58
      %p65 = scmp.eq.s32.totalorder %s23, 3
      %p66 = por %p64, %p65
      %p67 = scmp.ne.s32.totalorder %s59, %s62
      %p68 = scmp.eq.s32.totalorder %s23, 0
      %p69 = por %p67, %p68
      %p70 = scmp.ne.s32.totalorder %s59, %s62
      %p71 = scmp.eq.s32.totalorder %s28, 3
      %p72 = por %p70, %p71
      %p73 = scmp.ne.s32.totalorder %s62, %s63
      %p74 = scmp.eq.s32.totalorder %s28, 0
      %p75 = por %p73, %p74
      %p76 = scmp.ne.s32.totalorder %s62, %s63
      %p77 = scmp.eq.s32.totalorder %s29, 3
      %p78 = por %p76, %p77
      %p80 = scmp.ne.s32.totalorder %s63, %s79
      %p81 = scmp.eq.s32.totalorder %s29, 0
      %p82 = por %p80, %p81
      %s84 = sadd.s32 %s83, 1
      %p87 = scmp.eq.s32.totalorder %s23, 3
      %p88 = scmp.ne.s32.totalorder %s83, %s85
      %p89 = scmp.eq.s32.totalorder %s23, 0
      %p90 = por %p88, %p89
      %p91 = scmp.ne.s32.totalorder %s83, %s85
      %p92 = scmp.eq.s32.totalorder %s28, 3
      %p93 = por %p91, %p92
      %p94 = scmp.ne.s32.totalorder %s85, %s86
      %p95 = scmp.eq.s32.totalorder %s28, 0
      %p96 = por %p94, %p95
      %p97 = scmp.ne.s32.totalorder %s85, %s86
      %p98 = scmp.eq.s32.totalorder %s29, 3
      %p99 = por %p97, %p98
      %p101 = scmp.ne.s32.totalorder %s86, %s100
      %p102 = scmp.eq.s32.totalorder %s29, 0
      %p103 = por %p101, %p102
      %s105 = sadd.s32 %s104, 1
      %p108 = scmp.eq.s32.totalorder %s23, 3
      %p109 = scmp.ne.s32.totalorder %s104, %s106
      %p110 = scmp.eq.s32.totalorder %s23, 0
      %p111 = por %p109, %p110
      %p112 = scmp.ne.s32.totalorder %s104, %s106
      %p113 = scmp.eq.s32.totalorder %s28, 3
      %p114 = por %p112, %p113
      %p115 = scmp.ne.s32.totalorder %s106, %s107
      %p116 = scmp.eq.s32.totalorder %s28, 0
      %p117 = por %p115, %p116
      %p118 = scmp.ne.s32.totalorder %s106, %s107
      %p119 = scmp.eq.s32.totalorder %s29, 3
      %p120 = por %p118, %p119
      %p122 = scmp.ne.s32.totalorder %s107, %s121
      %p123 = scmp.eq.s32.totalorder %s29, 0
      %p124 = por %p122, %p123
      %s126 = sadd.s32 %s125, 1
      %p129 = scmp.eq.s32.totalorder %s23, 3
      %p130 = scmp.ne.s32.totalorder %s125, %s127
      %p131 = scmp.eq.s32.totalorder %s23, 0
      %p132 = por %p130, %p131
      %p133 = scmp.ne.s32.totalorder %s125, %s127
      %p134 = scmp.eq.s32.totalorder %s28, 3
      %p135 = por %p133, %p134
      %p136 = scmp.ne.s32.totalorder %s127, %s128
      %p137 = scmp.eq.s32.totalorder %s28, 0
      %p138 = por %p136, %p137
      %p139 = scmp.ne.s32.totalorder %s127, %s128
      %p140 = scmp.eq.s32.totalorder %s29, 3
      %p141 = por %p139, %p140
      %p143 = scmp.ne.s32.totalorder %s128, %s142
      %p144 = scmp.eq.s32.totalorder %s29, 0
      %p145 = por %p143, %p144
      %s147 = sadd.s32 %s146, 1
      %p150 = scmp.eq.s32.totalorder %s23, 3
      %p151 = scmp.ne.s32.totalorder %s146, %s148
      %p152 = scmp.eq.s32.totalorder %s23, 0
      %p153 = por %p151, %p152
      %p154 = scmp.ne.s32.totalorder %s146, %s148
      %p155 = scmp.eq.s32.totalorder %s28, 3
      %p156 = por %p154, %p155
      %p157 = scmp.ne.s32.totalorder %s148, %s149
      %p158 = scmp.eq.s32.totalorder %s28, 0
      %p159 = por %p157, %p158
      %p160 = scmp.ne.s32.totalorder %s148, %s149
      %p161 = scmp.eq.s32.totalorder %s29, 3
      %p162 = por %p160, %p161
      %p164 = scmp.ne.s32.totalorder %s149, %s163
      %p165 = scmp.eq.s32.totalorder %s29, 0
      %p166 = por %p164, %p165
      %s168 = sadd.s32 %s167, 1
      %p171 = scmp.eq.s32.totalorder %s23, 3
      %p172 = scmp.ne.s32.totalorder %s167, %s169
      %p173 = scmp.eq.s32.totalorder %s23, 0
      %p174 = por %p172, %p173
      %p175 = scmp.ne.s32.totalorder %s167, %s169
      %p176 = scmp.eq.s32.totalorder %s28, 3
      %p177 = por %p175, %p176
      %p178 = scmp.ne.s32.totalorder %s169, %s170
      %p179 = scmp.eq.s32.totalorder %s28, 0
      %p180 = por %p178, %p179
      %p181 = scmp.ne.s32.totalorder %s169, %s170
      %p182 = scmp.eq.s32.totalorder %s29, 3
      %p183 = por %p181, %p182
      %p185 = scmp.ne.s32.totalorder %s170, %s184
      %p186 = scmp.eq.s32.totalorder %s29, 0
      %p187 = por %p185, %p186
      %s189 = sadd.s32 %s188, 1
      %p192 = scmp.eq.s32.totalorder %s23, 3
      %p193 = scmp.ne.s32.totalorder %s188, %s190
      %p194 = scmp.eq.s32.totalorder %s23, 0
      %p195 = por %p193, %p194
      %p196 = scmp.ne.s32.totalorder %s188, %s190
      %p197 = scmp.eq.s32.totalorder %s28, 3
      %p198 = por %p196, %p197
      %p199 = scmp.ne.s32.totalorder %s190, %s191
      %p200 = scmp.eq.s32.totalorder %s28, 0
      %p201 = por %p199, %p200
      %p202 = scmp.ne.s32.totalorder %s190, %s191
      %p203 = scmp.eq.s32.totalorder %s29, 3
      %p204 = por %p202, %p203
      %p206 = scmp.ne.s32.totalorder %s191, %s205
      %p207 = scmp.eq.s32.totalorder %s29, 0
      %p208 = por %p206, %p207
      %s210 = sadd.s32 %s209, 1
      %p213 = scmp.eq.s32.totalorder %s23, 3
      %p214 = scmp.ne.s32.totalorder %s209, %s211
      %p215 = scmp.eq.s32.totalorder %s23, 0
      %p216 = por %p214, %p215
      %p217 = scmp.ne.s32.totalorder %s209, %s211
      %p218 = scmp.eq.s32.totalorder %s28, 3
      %p219 = por %p217, %p218
      %p220 = scmp.ne.s32.totalorder %s211, %s212
      %p221 = scmp.eq.s32.totalorder %s28, 0
      %p222 = por %p220, %p221
      %p223 = scmp.ne.s32.totalorder %s211, %s212
      %p224 = scmp.eq.s32.totalorder %s29, 3
      %p225 = por %p223, %p224
      %p227 = scmp.ne.s32.totalorder %s212, %s226
      %p228 = scmp.eq.s32.totalorder %s29, 0
      %p229 = por %p227, %p228
      %s230 = ssub.s32 %s23, %s30
      %p231 = scmp.eq.s32.totalorder %s230, 0
      %s233 = sadd.s32 %s232, 1
      %s234 = scalar_select %p231, %s232, %s233
      %p237 = pneg %p231
      %p238 = scmp.eq.s32.totalorder %s23, 3
      %p239 = por %p237, %p238
      %p240 = scmp.ne.s32.totalorder %s232, %s235
      %p241 = scmp.eq.s32.totalorder %s23, 0
      %p242 = por %p240, %p241
      %p243 = scmp.ne.s32.totalorder %s232, %s235
      %p244 = scmp.eq.s32.totalorder %s28, 3
      %p245 = por %p243, %p244
      %p246 = scmp.ne.s32.totalorder %s235, %s236
      %p247 = scmp.eq.s32.totalorder %s28, 0
      %p248 = por %p246, %p247
      %p249 = scmp.ne.s32.totalorder %s235, %s236
      %p250 = scmp.eq.s32.totalorder %s29, 3
      %p251 = por %p249, %p250
      %p253 = scmp.ne.s32.totalorder %s236, %s252
      %p254 = scmp.eq.s32.totalorder %s29, 0
      %p255 = por %p253, %p254
      %p256 = scmp.le.s32.totalorder 1, %s23
      %p257 = scmp.lt.s32.totalorder %s23, 5
      %p258 = pnand %p256, %p257
      %p259 = pneg %p258
      // Predicated region
      $region9: #{tpu_custom_call.1} parent=5 // pred_check
        _
      $region10: #{tpu_custom_call.1} parent=5 // pred_check_branch
        %261 = sbr.rel (%p258) target = $region12
      $region11: #{tpu_custom_call.1} parent=5 // pred_region
        %s262 = ssub.s32 %s23, 1
        // Predicated region
        $region13: #{tpu_custom_call.1} parent=11 // pred_check
          %p263 = pneg %p96
        $region14: #{tpu_custom_call.1} parent=11 // pred_check_branch
          %265 = sbr.rel (%p263) target = $region16
        $region15: #{tpu_custom_call.1} parent=11 // pred_region
          _
        $region16: #{tpu_custom_call.1} parent=11 // pred_fallthru
          _
        // Predicated region
        $region17: #{tpu_custom_call.1} parent=11 // pred_check
          %p266 = pneg %p117
        $region18: #{tpu_custom_call.1} parent=11 // pred_check_branch
          %268 = sbr.rel (%p266) target = $region20
        $region19: #{tpu_custom_call.1} parent=11 // pred_region
          %s270 = ssub.s32 512, 512
          %271 = vsyncadd [#allocation6], %s270
          %s272 = sshll.u32 [#allocation5], 4
          %s273 = int_to_ptr.vmem [resolvable:$true] %s272
          %278 = dma.hbm_to_vmem [thread:$0]  %s3, 512, %s273, [#allocation6], 128, 128, 8
        $region20: #{tpu_custom_call.1} parent=11 // pred_fallthru
          _
        // Predicated region
        $region21: #{tpu_custom_call.1} parent=11 // pred_check
          %p279 = pneg %p138
        $region22: #{tpu_custom_call.1} parent=11 // pred_check_branch
          %281 = sbr.rel (%p279) target = $region24
        $region23: #{tpu_custom_call.1} parent=11 // pred_region
          %s283 = ssub.s32 128, 128
          %284 = vsyncadd [#allocation6], %s283
          %s286 = sshll.u32 [#allocation7], 4
          %s287 = int_to_ptr.vmem [resolvable:$true] %s286
          %289 = dma.hbm_to_vmem [thread:$0]  %s4, 128, %s287, [#allocation6]
        $region24: #{tpu_custom_call.1} parent=11 // pred_fallthru
          _
        // Predicated region
        $region25: #{tpu_custom_call.1} parent=11 // pred_check
          %p290 = pneg %p159
        $region26: #{tpu_custom_call.1} parent=11 // pred_check_branch
          %292 = sbr.rel (%p290) target = $region28
        $region27: #{tpu_custom_call.1} parent=11 // pred_region
          _
        $region28: #{tpu_custom_call.1} parent=11 // pred_fallthru
          _
        // Predicated region
        $region29: #{tpu_custom_call.1} parent=11 // pred_check
          %p293 = pneg %p180
        $region30: #{tpu_custom_call.1} parent=11 // pred_check_branch
          %295 = sbr.rel (%p293) target = $region32
        $region31: #{tpu_custom_call.1} parent=11 // pred_region
          %s297 = ssub.s32 512, 512
          %298 = vsyncadd [#allocation9], %s297
          %s299 = sshll.u32 [#allocation8], 4
          %s300 = int_to_ptr.vmem [resolvable:$true] %s299
          %305 = dma.hbm_to_vmem [thread:$0]  %s6, 512, %s300, [#allocation9], 128, 128, 8
        $region32: #{tpu_custom_call.1} parent=11 // pred_fallthru
          _
        // Predicated region
        $region33: #{tpu_custom_call.1} parent=11 // pred_check
          %p306 = pneg %p201
        $region34: #{tpu_custom_call.1} parent=11 // pred_check_branch
          %308 = sbr.rel (%p306) target = $region36
        $region35: #{tpu_custom_call.1} parent=11 // pred_region
          %s310 = ssub.s32 2048, 2048
          %311 = vsyncadd [#allocation9], %s310
          %s312 = sshll.u32 [#allocation10], 4
          %s313 = int_to_ptr.vmem [resolvable:$true] %s312
          %318 = dma.hbm_to_vmem [thread:$0]  %s7, 2048, %s313, [#allocation9], 128, 128, 8
        $region36: #{tpu_custom_call.1} parent=11 // pred_fallthru
          _
        // Predicated region
        $region37: #{tpu_custom_call.1} parent=11 // pred_check
          %p319 = pneg %p222
        $region38: #{tpu_custom_call.1} parent=11 // pred_check_branch
          %321 = sbr.rel (%p319) target = $region40
        $region39: #{tpu_custom_call.1} parent=11 // pred_region
          _
        $region40: #{tpu_custom_call.1} parent=11 // pred_fallthru
          _
      $region12: #{tpu_custom_call.1} parent=5 // pred_fallthru
        _
      %p322 = scmp.lt.s32.totalorder %s23, 4
      // Predicated region
      $region41: #{tpu_custom_call.1} parent=5 // pred_check
        %p323 = pneg %p322
      $region42: #{tpu_custom_call.1} parent=5 // pred_check_branch
        %325 = sbr.rel (%p323) target = $region44
      $region43: #{tpu_custom_call.1} parent=5 // pred_region
        // Predicated region
        $region45: #{tpu_custom_call.1} parent=43 // pred_check
          %p326 = pneg %p43
        $region46: #{tpu_custom_call.1} parent=43 // pred_check_branch
          %328 = sbr.rel (%p326) target = $region48
        $region47: #{tpu_custom_call.1} parent=43 // pred_region
          %p329 = scmp.lt.s32.totalorder %s23, 3
          %s330 = scalar_select %p329, %s23, 3
          %s331 = smul.addr %s330, 3
          %s332 = smul.addr %s331, 4
          %s333 = scalar_lea.vmem %s0, %s332
        $region48: #{tpu_custom_call.1} parent=43 // pred_fallthru
          _
        // Predicated region
        $region49: #{tpu_custom_call.1} parent=43 // pred_check
          %p334 = pneg %p69
        $region50: #{tpu_custom_call.1} parent=43 // pred_check_branch
          %336 = sbr.rel (%p334) target = $region52
        $region51: #{tpu_custom_call.1} parent=43 // pred_region
          %s337 = sand.u32 %s59, 1
          %s338 = scalar_lea.sflag [#allocation3], %s337
          %s339 = sand.u32 %s59, 1
          %s340 = scalar_lea.vmem [#allocation2], %s339
          %s342 = ssub.s32 16, 16
          %343 = vsyncadd %s338, %s342
          %s344 = smul.addr %s23, 16
          %s345 = scalar_lea.hbm %s1, %s344
          %s347 = sshll.u32 %s340, 4
          %s348 = int_to_ptr.vmem [resolvable:$true] %s347
          %350 = dma.hbm_to_vmem [thread:$0]  %s345, 16, %s348, %s338
        $region52: #{tpu_custom_call.1} parent=43 // pred_fallthru
          _
      $region44: #{tpu_custom_call.1} parent=5 // pred_fallthru
        _
      %p351 = scmp.le.s32.totalorder 1, %s23
      %p352 = scmp.lt.s32.totalorder %s23, 5
      %p353 = pnand %p351, %p352
      %p354 = pneg %p353
      // Predicated region
      $region53: #{tpu_custom_call.1} parent=5 // pred_check
        _
      $region54: #{tpu_custom_call.1} parent=5 // pred_check_branch
        %356 = sbr.rel (%p353) target = $region56
      $region55: #{tpu_custom_call.1} parent=5 // pred_region
        %s357 = ssub.s32 %s23, 1
        %s358 = sand.u32 %s62, 1
        %s359 = scalar_lea.sflag [#allocation3], %s358
        %s360 = sand.u32 %s62, 1
        %s361 = scalar_lea.vmem [#allocation2], %s360
        // Predicated region
        $region57: #{tpu_custom_call.1} parent=55 // pred_check
          %p362 = pneg %p75
        $region58: #{tpu_custom_call.1} parent=55 // pred_check_branch
          %364 = sbr.rel (%p362) target = $region60
        $region59: #{tpu_custom_call.1} parent=55 // pred_region
          %365 = dma.done %s359, 16
        $region60: #{tpu_custom_call.1} parent=55 // pred_fallthru
          _
        // Predicated region
        $region61: #{tpu_custom_call.1} parent=55 // pred_check
          %p366 = pneg %p117
        $region62: #{tpu_custom_call.1} parent=55 // pred_check_branch
          %368 = sbr.rel (%p366) target = $region64
        $region63: #{tpu_custom_call.1} parent=55 // pred_region
          %369 = dma.done [#allocation6], 512
        $region64: #{tpu_custom_call.1} parent=55 // pred_fallthru
          _
        // Predicated region
        $region65: #{tpu_custom_call.1} parent=55 // pred_check
          %p370 = pneg %p138
        $region66: #{tpu_custom_call.1} parent=55 // pred_check_branch
          %372 = sbr.rel (%p370) target = $region68
        $region67: #{tpu_custom_call.1} parent=55 // pred_region
          %373 = dma.done [#allocation6], 128
        $region68: #{tpu_custom_call.1} parent=55 // pred_fallthru
          _
        // Predicated region
        $region69: #{tpu_custom_call.1} parent=55 // pred_check
          %p374 = pneg %p180
        $region70: #{tpu_custom_call.1} parent=55 // pred_check_branch
          %376 = sbr.rel (%p374) target = $region72
        $region71: #{tpu_custom_call.1} parent=55 // pred_region
          %377 = dma.done [#allocation9], 512
        $region72: #{tpu_custom_call.1} parent=55 // pred_fallthru
          _
        // Predicated region
        $region73: #{tpu_custom_call.1} parent=55 // pred_check
          %p378 = pneg %p201
        $region74: #{tpu_custom_call.1} parent=55 // pred_check_branch
          %380 = sbr.rel (%p378) target = $region76
        $region75: #{tpu_custom_call.1} parent=55 // pred_region
          %381 = dma.done [#allocation9], 2048
        $region76: #{tpu_custom_call.1} parent=55 // pred_fallthru
          _
        %p382 = scmp.lt.s32.totalorder %s28, 3
        %s383 = scalar_select %p382, %s28, 3
        %s384 = smul.addr %s383, 3
        %s385 = smul.addr %s384, 4
        %s386 = scalar_lea.vmem %s0, %s385
        %p387 = pneg %p49
        %p388 = pneg %p46
        %s389 = sand.u32 %s62, 1
        %s390 = scalar_lea.sflag [#allocation3], %s389
        %s391 = sand.u32 %s62, 1
        %s392 = scalar_lea.vmem [#allocation2], %s391
        %p393 = pneg %p75
        %p394 = pneg %p72
        %p395 = pneg %p96
        %p396 = pneg %p93
        %p397 = pneg %p117
        %p398 = pneg %p114
        %p399 = pneg %p138
        %p400 = pneg %p135
        %p401 = pneg %p159
        %p402 = pneg %p156
        %p403 = pneg %p180
        %p404 = pneg %p177
        %p405 = pneg %p201
        %p406 = pneg %p198
        %p407 = pneg %p222
        %p408 = pneg %p219
        %p409 = pneg %p248
        %p410 = pneg %p245
        %s411 = sand.u32 %s235, 1
        %s412 = scalar_lea.sflag [#allocation4], %s411
        %s413 = sand.u32 %s235, 1
        %s414 = smul.addr %s413, 8
        %s415 = scalar_lea.vmem [#allocation11], %s414
        %p416 = scmp.lt.s32.totalorder %s28, 3
        %s417 = scalar_select %p416, %s28, 3
        %s418 = smul.addr %s417, 3
        %s419 = smul.addr %s418, 4
        %s420 = scalar_lea.vmem %s0, %s419
        %v422 = vld [vmem:[%s8] sm:$0x1]
        %v423 = vld [vmem:[%s8 + $0x1] sm:$0x1]
        %v424 = vld [vmem:[%s8 + $0x2] sm:$0x1]
        %v425 = vld [vmem:[%s420] sm:$0xf]
        %v426 = vld [vmem:[%s420 + $0x4] sm:$0xf]
        %v427 = vld [vmem:[%s420 + $0x8] sm:$0x1]
        %v428 = vunpack.c.l.bf16 %v425
        %v429 = vunpack.c.l.bf16 %v426
        %v430 = vunpack.c.l.bf16 %v427
        %v431 = vld [vmem:[%s2] sm:$0x7]
        %s432 = scalar_lea.vmem %s2, 4
        %v433 = vld [vmem:[%s432] sm:$0x7]
        %vm437 = vcmask 1046528
        %v438 = vrot.slane %v428, 1
        %v439 = vrot.slane %v429, 1
        %v440 = vsel %vm437, %v438, %v439
        %v441 = vrot.slane %v430, 1
        %v442 = vsel %vm437, %v439, %v441
        %vm443 = vcmask 48128
        %v444 = vsel %vm443, %v440, 0
        %v446 = vsel %vm443, %v442, 0
        %vm448 = vcmask 1042432
        %v450 = vsel %vm448, %v433, 0
        %452 = vmatprep.subr.bf16.mxu0 0
        %453 = vmatpush1.bf16.msra.mxu0 %v450
        %454 = vmatprep.subr.bf16.mxu0 0
        %455 = vmatpush1.bf16.msra.mxu0 0
        %456 = vmatprep.subr.bf16.mxu0 0
        %457 = vmatpush1.bf16.msra.mxu0 0
        %458 = vmatprep.subr.bf16.mxu0 0
        %459 = vmatpush1.bf16.msra.mxu0 0
        %460 = vmatprep.subr.bf16.mxu0 0
        %461 = vmatpush1.bf16.msra.mxu0 0
        %462 = vmatprep.subr.bf16.mxu0 0
        %463 = vmatpush1.bf16.msra.mxu0 0
        %464 = vmatprep.subr.bf16.mxu0 0
        %465 = vmatpush1.bf16.msra.mxu0 0
        %466 = vmatprep.subr.bf16.mxu0 0
        %467 = vmatpush1.bf16.msra.mxu0 0
        %468 = vmatprep.subr.bf16.mxu0 0
        %469 = vmatpush1.bf16.msra.mxu0 0
        %470 = vmatprep.subr.bf16.mxu0 0
        %471 = vmatpush1.bf16.msra.mxu0 0
        %472 = vmatprep.subr.bf16.mxu0 0
        %473 = vmatpush1.bf16.msra.mxu0 0
        %474 = vmatprep.subr.bf16.mxu0 0
        %475 = vmatpush1.bf16.msra.mxu0 0
        %476 = vmatprep.subr.bf16.mxu0 0
        %477 = vmatpush1.bf16.msra.mxu0 0
        %478 = vmatprep.subr.bf16.mxu0 0
        %479 = vmatpush1.bf16.msra.mxu0 0
        %480 = vmatprep.subr.bf16.mxu0 0
        %481 = vmatpush1.bf16.msra.mxu0 0
        %482 = vmatprep.subr.bf16.mxu0 0
        %483 = vmatpush1.bf16.msra.mxu0 0
        %484 = vmatprep.mubr.f32.mxu0 0.0
        %485 = vmatmul.mubr.f32.gmra.mrb[0].mxu0 %v444
        %v486 = vpop.f32.mrb[0].mxu0
        %v487 = vadd.f32 0.0, %v486
        %v488 = vpop.f32.mrb[0].mxu0
        %489 = vmatprep.mubr.f32.mxu0 0.0
        %490 = vmatmul.mubr.f32.gmra.mrb[0].mxu0 %v446
        %v491 = vpop.f32.mrb[0].mxu0
        %v492 = vadd.f32 0.0, %v491
        %v493 = vpop.f32.mrb[0].mxu0
        %494 = vdwg.mxu0
        %v495 = vsel %vm443, %v428, 0
        %v497 = vsel %vm443, %v429, 0
        %v500 = vsel %vm448, %v431, 0
        %502 = vmatprep.subr.bf16.mxu0 0
        %503 = vmatpush1.bf16.msra.mxu0 %v500
        %504 = vmatprep.subr.bf16.mxu0 0
        %505 = vmatpush1.bf16.msra.mxu0 0
        %506 = vmatprep.subr.bf16.mxu0 0
        %507 = vmatpush1.bf16.msra.mxu0 0
        %508 = vmatprep.subr.bf16.mxu0 0
        %509 = vmatpush1.bf16.msra.mxu0 0
        %510 = vmatprep.subr.bf16.mxu0 0
        %511 = vmatpush1.bf16.msra.mxu0 0
        %512 = vmatprep.subr.bf16.mxu0 0
        %513 = vmatpush1.bf16.msra.mxu0 0
        %514 = vmatprep.subr.bf16.mxu0 0
        %515 = vmatpush1.bf16.msra.mxu0 0
        %516 = vmatprep.subr.bf16.mxu0 0
        %517 = vmatpush1.bf16.msra.mxu0 0
        %518 = vmatprep.subr.bf16.mxu0 0
        %519 = vmatpush1.bf16.msra.mxu0 0
        %520 = vmatprep.subr.bf16.mxu0 0
        %521 = vmatpush1.bf16.msra.mxu0 0
        %522 = vmatprep.subr.bf16.mxu0 0
        %523 = vmatpush1.bf16.msra.mxu0 0
        %524 = vmatprep.subr.bf16.mxu0 0
        %525 = vmatpush1.bf16.msra.mxu0 0
        %526 = vmatprep.subr.bf16.mxu0 0
        %527 = vmatpush1.bf16.msra.mxu0 0
        %528 = vmatprep.subr.bf16.mxu0 0
        %529 = vmatpush1.bf16.msra.mxu0 0
        %530 = vmatprep.subr.bf16.mxu0 0
        %531 = vmatpush1.bf16.msra.mxu0 0
        %532 = vmatprep.subr.bf16.mxu0 0
        %533 = vmatpush1.bf16.msra.mxu0 0
        %534 = vmatprep.mubr.f32.mxu0 0.0
        %535 = vmatmul.mubr.f32.gmra.mrb[0].mxu0 %v495
        %v536 = vpop.f32.mrb[0].mxu0
        %v537 = vadd.f32 %v487, %v536
        %v538 = vpop.f32.mrb[0].mxu0
        %539 = vmatprep.mubr.f32.mxu0 0.0
        %540 = vmatmul.mubr.f32.gmra.mrb[0].mxu0 %v497
        %v541 = vpop.f32.mrb[0].mxu0
        %v542 = vadd.f32 %v492, %v541
        %v543 = vpop.f32.mrb[0].mxu0
        %544 = vdwg.mxu0
        %s545 = scalar_lea.vmem %s2, 8
        %v546 = vld [vmem:[%s545] sm:$0x7]
        %vm547 = vcmask 1045504
        %v548 = vrot.slane %v428, 2
        %v549 = vrot.slane %v429, 2
        %v550 = vsel %vm547, %v548, %v549
        %v551 = vrot.slane %v430, 2
        %v552 = vsel %vm547, %v549, %v551
        %v553 = vsel %vm443, %v550, 0
        %v555 = vsel %vm443, %v552, 0
        %v558 = vsel %vm448, %v546, 0
        %560 = vmatprep.subr.bf16.mxu0 0
        %561 = vmatpush1.bf16.msra.mxu0 %v558
        %562 = vmatprep.subr.bf16.mxu0 0
        %563 = vmatpush1.bf16.msra.mxu0 0
        %564 = vmatprep.subr.bf16.mxu0 0
        %565 = vmatpush1.bf16.msra.mxu0 0
        %566 = vmatprep.subr.bf16.mxu0 0
        %567 = vmatpush1.bf16.msra.mxu0 0
        %568 = vmatprep.subr.bf16.mxu0 0
        %569 = vmatpush1.bf16.msra.mxu0 0
        %570 = vmatprep.subr.bf16.mxu0 0
        %571 = vmatpush1.bf16.msra.mxu0 0
        %572 = vmatprep.subr.bf16.mxu0 0
        %573 = vmatpush1.bf16.msra.mxu0 0
        %574 = vmatprep.subr.bf16.mxu0 0
        %575 = vmatpush1.bf16.msra.mxu0 0
        %576 = vmatprep.subr.bf16.mxu0 0
        %577 = vmatpush1.bf16.msra.mxu0 0
        %578 = vmatprep.subr.bf16.mxu0 0
        %579 = vmatpush1.bf16.msra.mxu0 0
        %580 = vmatprep.subr.bf16.mxu0 0
        %581 = vmatpush1.bf16.msra.mxu0 0
        %582 = vmatprep.subr.bf16.mxu0 0
        %583 = vmatpush1.bf16.msra.mxu0 0
        %584 = vmatprep.subr.bf16.mxu0 0
        %585 = vmatpush1.bf16.msra.mxu0 0
        %586 = vmatprep.subr.bf16.mxu0 0
        %587 = vmatpush1.bf16.msra.mxu0 0
        %588 = vmatprep.subr.bf16.mxu0 0
        %589 = vmatpush1.bf16.msra.mxu0 0
        %590 = vmatprep.subr.bf16.mxu0 0
        %591 = vmatpush1.bf16.msra.mxu0 0
        %592 = vmatprep.mubr.f32.mxu0 0.0
        %593 = vmatmul.mubr.f32.gmra.mrb[0].mxu0 %v553
        %v594 = vpop.f32.mrb[0].mxu0
        %v595 = vadd.f32 0.0, %v594
        %v596 = vpop.f32.mrb[0].mxu0
        %597 = vmatprep.mubr.f32.mxu0 0.0
        %598 = vmatmul.mubr.f32.gmra.mrb[0].mxu0 %v555
        %v599 = vpop.f32.mrb[0].mxu0
        %v600 = vadd.f32 0.0, %v599
        %v601 = vpop.f32.mrb[0].mxu0
        %602 = vdwg.mxu0
        %v603 = vadd.f32 %v537, %v595
        %v604 = vadd.f32 %v542, %v600
        %v606 = vlaneseq
        %v607 = vshrl.u32 %v606, 7
        %v608 = vsub.s32 0, %v607
        %v609 = vrot.slane %v422, %v608
        %v611 = vadd.f32 %v603, %v609
        %v612 = vadd.f32 %v604, %v609
        %vm613 = vcmp.gt.f32.partialorder %v611, 0.0
        %vm614 = vcmp.gt.f32.partialorder %v612, 0.0
        %v615 = vmul.f32 %v611, 0.01
        %v616 = vmul.f32 %v612, 0.01
        %v617 = vsel %vm613, %v611, %v615
        %v618 = vsel %vm614, %v612, %v616
        %vm619 = vcmask 261120
        %v620 = vsel %vm619, %v617, 0.0
        %v621 = vsel %vm619, %v618, 0.0
        %v622 = vadd.f32 %v620, %v621
        %v623 = vrot.slane %v622, 4
        %v624 = vadd.f32 %v622, %v623
        %v625 = vrot.slane %v624, 2
        %v626 = vadd.f32 %v624, %v625
        %v627 = vrot.slane %v626, 1
        %v628 = vadd.f32 %v626, %v627
        %v629 = vmul.f32 %v628, 0.0625
        %v630 = vld [vmem:[#allocation5] sm:$0xff]
        %v631 = vld [vmem:[#allocation5 + $0x8] sm:$0xff]
        %v632 = vld [vmem:[#allocation5 + $0x10] sm:$0xff]
        %v633 = vld [vmem:[#allocation5 + $0x18] sm:$0xff]
        %634 = vrot.lane.b32.xlu0 %v609, 96
        %v635 = vpop.permute.xlu0 %634
        %v638 = vsel %vm619, %v629, 0
        %640 = vmatprep.subr.mxu0 0.0
        %641 = vmatpush1.msra.mxu0 %v630
        %642 = vmatprep.subr.mxu0 0.0
        %643 = vmatpush1.msra.mxu0 %v631
        %644 = vmatprep.subr.mxu0 0.0
        %645 = vmatpush1.msra.mxu0 %v632
        %646 = vmatprep.subr.mxu0 0.0
        %647 = vmatpush1.msra.mxu0 %v633
        %648 = vmatprep.subr.mxu0 0.0
        %649 = vmatpush1.msra.mxu0 0.0
        %650 = vmatprep.subr.mxu0 0.0
        %651 = vmatpush1.msra.mxu0 0.0
        %652 = vmatprep.subr.mxu0 0.0
        %653 = vmatpush1.msra.mxu0 0.0
        %654 = vmatprep.subr.mxu0 0.0
        %655 = vmatpush1.msra.mxu0 0.0
        %656 = vmatprep.subr.mxu0 0.0
        %657 = vmatpush1.msra.mxu0 0.0
        %658 = vmatprep.subr.mxu0 0.0
        %659 = vmatpush1.msra.mxu0 0.0
        %660 = vmatprep.subr.mxu0 0.0
        %661 = vmatpush1.msra.mxu0 0.0
        %662 = vmatprep.subr.mxu0 0.0
        %663 = vmatpush1.msra.mxu0 0.0
        %664 = vmatprep.subr.mxu0 0.0
        %665 = vmatpush1.msra.mxu0 0.0
        %666 = vmatprep.subr.mxu0 0.0
        %667 = vmatpush1.msra.mxu0 0.0
        %668 = vmatprep.subr.mxu0 0.0
        %669 = vmatpush1.msra.mxu0 0.0
        %670 = vmatprep.subr.mxu0 0.0
        %671 = vmatpush1.msra.mxu0 0.0
        %672 = vmatprep.subr.mxu0 0.0
        %673 = vmatpush1.msra.mxu0 0.0
        %674 = vmatprep.subr.mxu0 0.0
        %675 = vmatpush1.msra.mxu0 0.0
        %676 = vmatprep.subr.mxu0 0.0
        %677 = vmatpush1.msra.mxu0 0.0
        %678 = vmatprep.subr.mxu0 0.0
        %679 = vmatpush1.msra.mxu0 0.0
        %680 = vmatprep.subr.mxu0 0.0
        %681 = vmatpush1.msra.mxu0 0.0
        %682 = vmatprep.subr.mxu0 0.0
        %683 = vmatpush1.msra.mxu0 0.0
        %684 = vmatprep.subr.mxu0 0.0
        %685 = vmatpush1.msra.mxu0 0.0
        %686 = vmatprep.subr.mxu0 0.0
        %687 = vmatpush1.msra.mxu0 0.0
        %688 = vmatprep.subr.mxu0 0.0
        %689 = vmatpush1.msra.mxu0 0.0
        %690 = vmatprep.subr.mxu0 0.0
        %691 = vmatpush1.msra.mxu0 0.0
        %692 = vmatprep.subr.mxu0 0.0
        %693 = vmatpush1.msra.mxu0 0.0
        %694 = vmatprep.subr.mxu0 0.0
        %695 = vmatpush1.msra.mxu0 0.0
        %696 = vmatprep.subr.mxu0 0.0
        %697 = vmatpush1.msra.mxu0 0.0
        %698 = vmatprep.subr.mxu0 0.0
        %699 = vmatpush1.msra.mxu0 0.0
        %700 = vmatprep.subr.mxu0 0.0
        %701 = vmatpush1.msra.mxu0 0.0
        %702 = vmatprep.subr.mxu0 0.0
        %703 = vmatpush1.msra.mxu0 0.0
        %704 = vmatprep.mubr.f32.mxu0 0.0
        %705 = vmatmul.mubr.f32.gmra.mrb[0].mxu0 %v638
        %v706 = vpop.f32.mrb[0].mxu0
        %v707 = vadd.f32 %v635, %v706
        %v708 = vpop.f32.mrb[0].mxu0
        %709 = vdwg.mxu0
        %vm710 = vcmp.gt.f32.partialorder %v707, 0.0
        %v711 = vmul.f32 %v707, 0.01
        %v712 = vsel %vm710, %v707, %v711
        %v713 = vld [vmem:[%s361] sm:$0x1]
        %v714 = vld [vmem:[#allocation7] sm:$0xff]
        %715 = vrot.lane.b32.xlu0 %v609, 32
        %v716 = vpop.permute.xlu0 %715
        %vm718 = vcmask 64512
        %v720 = vsel %vm718, %v713, 0
        %722 = vmatprep.subr.mxu0 0.0
        %723 = vmatpush1.msra.mxu0 %v714
        %724 = vmatprep.subr.mxu0 0.0
        %725 = vmatpush1.msra.mxu0 0.0
        %726 = vmatprep.subr.mxu0 0.0
        %727 = vmatpush1.msra.mxu0 0.0
        %728 = vmatprep.subr.mxu0 0.0
        %729 = vmatpush1.msra.mxu0 0.0
        %730 = vmatprep.subr.mxu0 0.0
        %731 = vmatpush1.msra.mxu0 0.0
        %732 = vmatprep.subr.mxu0 0.0
        %733 = vmatpush1.msra.mxu0 0.0
        %734 = vmatprep.subr.mxu0 0.0
        %735 = vmatpush1.msra.mxu0 0.0
        %736 = vmatprep.subr.mxu0 0.0
        %737 = vmatpush1.msra.mxu0 0.0
        %738 = vmatprep.subr.mxu0 0.0
        %739 = vmatpush1.msra.mxu0 0.0
        %740 = vmatprep.subr.mxu0 0.0
        %741 = vmatpush1.msra.mxu0 0.0
        %742 = vmatprep.subr.mxu0 0.0
        %743 = vmatpush1.msra.mxu0 0.0
        %744 = vmatprep.subr.mxu0 0.0
        %745 = vmatpush1.msra.mxu0 0.0
        %746 = vmatprep.subr.mxu0 0.0
        %747 = vmatpush1.msra.mxu0 0.0
        %748 = vmatprep.subr.mxu0 0.0
        %749 = vmatpush1.msra.mxu0 0.0
        %750 = vmatprep.subr.mxu0 0.0
        %751 = vmatpush1.msra.mxu0 0.0
        %752 = vmatprep.subr.mxu0 0.0
        %753 = vmatpush1.msra.mxu0 0.0
        %754 = vmatprep.subr.mxu0 0.0
        %755 = vmatpush1.msra.mxu0 0.0
        %756 = vmatprep.subr.mxu0 0.0
        %757 = vmatpush1.msra.mxu0 0.0
        %758 = vmatprep.subr.mxu0 0.0
        %759 = vmatpush1.msra.mxu0 0.0
        %760 = vmatprep.subr.mxu0 0.0
        %761 = vmatpush1.msra.mxu0 0.0
        %762 = vmatprep.subr.mxu0 0.0
        %763 = vmatpush1.msra.mxu0 0.0
        %764 = vmatprep.subr.mxu0 0.0
        %765 = vmatpush1.msra.mxu0 0.0
        %766 = vmatprep.subr.mxu0 0.0
        %767 = vmatpush1.msra.mxu0 0.0
        %768 = vmatprep.subr.mxu0 0.0
        %769 = vmatpush1.msra.mxu0 0.0
        %770 = vmatprep.subr.mxu0 0.0
        %771 = vmatpush1.msra.mxu0 0.0
        %772 = vmatprep.subr.mxu0 0.0
        %773 = vmatpush1.msra.mxu0 0.0
        %774 = vmatprep.subr.mxu0 0.0
        %775 = vmatpush1.msra.mxu0 0.0
        %776 = vmatprep.subr.mxu0 0.0
        %777 = vmatpush1.msra.mxu0 0.0
        %778 = vmatprep.subr.mxu0 0.0
        %779 = vmatpush1.msra.mxu0 0.0
        %780 = vmatprep.subr.mxu0 0.0
        %781 = vmatpush1.msra.mxu0 0.0
        %782 = vmatprep.subr.mxu0 0.0
        %783 = vmatpush1.msra.mxu0 0.0
        %784 = vmatprep.subr.mxu0 0.0
        %785 = vmatpush1.msra.mxu0 0.0
        %786 = vmatprep.mubr.f32.mxu0 0.0
        %787 = vmatmul.mubr.f32.gmra.mrb[0].mxu0 %v720
        %v788 = vpop.f32.mrb[0].mxu0
        %v789 = vadd.f32 %v716, %v788
        %v790 = vpop.f32.mrb[0].mxu0
        %791 = vdwg.mxu0
        %vm792 = vcmp.gt.f32.partialorder %v789, 0.0
        %v793 = vmul.f32 %v789, 0.01
        %v794 = vsel %vm792, %v789, %v793
        %v795 = vld [vmem:[%s5] sm:$0xff]
        %v796 = vld [vmem:[%s5 + $0x8] sm:$0xff]
        %v797 = vld [vmem:[%s5 + $0x10] sm:$0xff]
        %v798 = vld [vmem:[%s5 + $0x18] sm:$0xff]
        %v799 = vld [vmem:[%s5 + $0x20] sm:$0xff]
        %v800 = vld [vmem:[%s5 + $0x28] sm:$0xff]
        %v801 = vld [vmem:[%s5 + $0x30] sm:$0xff]
        %v802 = vld [vmem:[%s5 + $0x38] sm:$0xff]
        %v803 = vld [vmem:[#allocation8] sm:$0xff]
        %v804 = vld [vmem:[#allocation8 + $0x8] sm:$0xff]
        %v805 = vld [vmem:[#allocation8 + $0x10] sm:$0xff]
        %v806 = vld [vmem:[#allocation8 + $0x18] sm:$0xff]
        %v808 = vsel %vm619, %v794, 0
        %810 = vmatprep.subr.mxu0 0.0
        %811 = vmatpush1.msra.mxu0 %v803
        %812 = vmatprep.subr.mxu0 0.0
        %813 = vmatpush1.msra.mxu0 %v804
        %814 = vmatprep.subr.mxu0 0.0
        %815 = vmatpush1.msra.mxu0 %v805
        %816 = vmatprep.subr.mxu0 0.0
        %817 = vmatpush1.msra.mxu0 %v806
        %818 = vmatprep.subr.mxu0 0.0
        %819 = vmatpush1.msra.mxu0 0.0
        %820 = vmatprep.subr.mxu0 0.0
        %821 = vmatpush1.msra.mxu0 0.0
        %822 = vmatprep.subr.mxu0 0.0
        %823 = vmatpush1.msra.mxu0 0.0
        %824 = vmatprep.subr.mxu0 0.0
        %825 = vmatpush1.msra.mxu0 0.0
        %826 = vmatprep.subr.mxu0 0.0
        %827 = vmatpush1.msra.mxu0 0.0
        %828 = vmatprep.subr.mxu0 0.0
        %829 = vmatpush1.msra.mxu0 0.0
        %830 = vmatprep.subr.mxu0 0.0
        %831 = vmatpush1.msra.mxu0 0.0
        %832 = vmatprep.subr.mxu0 0.0
        %833 = vmatpush1.msra.mxu0 0.0
        %834 = vmatprep.subr.mxu0 0.0
        %835 = vmatpush1.msra.mxu0 0.0
        %836 = vmatprep.subr.mxu0 0.0
        %837 = vmatpush1.msra.mxu0 0.0
        %838 = vmatprep.subr.mxu0 0.0
        %839 = vmatpush1.msra.mxu0 0.0
        %840 = vmatprep.subr.mxu0 0.0
        %841 = vmatpush1.msra.mxu0 0.0
        %842 = vmatprep.subr.mxu0 0.0
        %843 = vmatpush1.msra.mxu0 0.0
        %844 = vmatprep.subr.mxu0 0.0
        %845 = vmatpush1.msra.mxu0 0.0
        %846 = vmatprep.subr.mxu0 0.0
        %847 = vmatpush1.msra.mxu0 0.0
        %848 = vmatprep.subr.mxu0 0.0
        %849 = vmatpush1.msra.mxu0 0.0
        %850 = vmatprep.subr.mxu0 0.0
        %851 = vmatpush1.msra.mxu0 0.0
        %852 = vmatprep.subr.mxu0 0.0
        %853 = vmatpush1.msra.mxu0 0.0
        %854 = vmatprep.subr.mxu0 0.0
        %855 = vmatpush1.msra.mxu0 0.0
        %856 = vmatprep.subr.mxu0 0.0
        %857 = vmatpush1.msra.mxu0 0.0
        %858 = vmatprep.subr.mxu0 0.0
        %859 = vmatpush1.msra.mxu0 0.0
        %860 = vmatprep.subr.mxu0 0.0
        %861 = vmatpush1.msra.mxu0 0.0
        %862 = vmatprep.subr.mxu0 0.0
        %863 = vmatpush1.msra.mxu0 0.0
        %864 = vmatprep.subr.mxu0 0.0
        %865 = vmatpush1.msra.mxu0 0.0
        %866 = vmatprep.subr.mxu0 0.0
        %867 = vmatpush1.msra.mxu0 0.0
        %868 = vmatprep.subr.mxu0 0.0
        %869 = vmatpush1.msra.mxu0 0.0
        %870 = vmatprep.subr.mxu0 0.0
        %871 = vmatpush1.msra.mxu0 0.0
        %872 = vmatprep.subr.mxu0 0.0
        %873 = vmatpush1.msra.mxu0 0.0
        %874 = vmatprep.mubr.f32.mxu0 0.0
        %875 = vmatmul.mubr.f32.gmra.mrb[0].mxu0 %v808
        %v876 = vpop.f32.mrb[0].mxu0
        %v877 = vadd.f32 0.0, %v876
        %v878 = vpop.f32.mrb[0].mxu0
        %879 = vdwg.mxu0
        %vm880 = vcmask 523264
        %v882 = vsel %vm880, %v712, 0
        %884 = vmatprep.subr.mxu0 0.0
        %885 = vmatpush1.msra.mxu0 %v795
        %886 = vmatprep.subr.mxu0 0.0
        %887 = vmatpush1.msra.mxu0 %v796
        %888 = vmatprep.subr.mxu0 0.0
        %889 = vmatpush1.msra.mxu0 %v797
        %890 = vmatprep.subr.mxu0 0.0
        %891 = vmatpush1.msra.mxu0 %v798
        %892 = vmatprep.subr.mxu0 0.0
        %893 = vmatpush1.msra.mxu0 %v799
        %894 = vmatprep.subr.mxu0 0.0
        %895 = vmatpush1.msra.mxu0 %v800
        %896 = vmatprep.subr.mxu0 0.0
        %897 = vmatpush1.msra.mxu0 %v801
        %898 = vmatprep.subr.mxu0 0.0
        %899 = vmatpush1.msra.mxu0 %v802
        %900 = vmatprep.subr.mxu0 0.0
        %901 = vmatpush1.msra.mxu0 0.0
        %902 = vmatprep.subr.mxu0 0.0
        %903 = vmatpush1.msra.mxu0 0.0
        %904 = vmatprep.subr.mxu0 0.0
        %905 = vmatpush1.msra.mxu0 0.0
        %906 = vmatprep.subr.mxu0 0.0
        %907 = vmatpush1.msra.mxu0 0.0
        %908 = vmatprep.subr.mxu0 0.0
        %909 = vmatpush1.msra.mxu0 0.0
        %910 = vmatprep.subr.mxu0 0.0
        %911 = vmatpush1.msra.mxu0 0.0
        %912 = vmatprep.subr.mxu0 0.0
        %913 = vmatpush1.msra.mxu0 0.0
        %914 = vmatprep.subr.mxu0 0.0
        %915 = vmatpush1.msra.mxu0 0.0
        %916 = vmatprep.subr.mxu0 0.0
        %917 = vmatpush1.msra.mxu0 0.0
        %918 = vmatprep.subr.mxu0 0.0
        %919 = vmatpush1.msra.mxu0 0.0
        %920 = vmatprep.subr.mxu0 0.0
        %921 = vmatpush1.msra.mxu0 0.0
        %922 = vmatprep.subr.mxu0 0.0
        %923 = vmatpush1.msra.mxu0 0.0
        %924 = vmatprep.subr.mxu0 0.0
        %925 = vmatpush1.msra.mxu0 0.0
        %926 = vmatprep.subr.mxu0 0.0
        %927 = vmatpush1.msra.mxu0 0.0
        %928 = vmatprep.subr.mxu0 0.0
        %929 = vmatpush1.msra.mxu0 0.0
        %930 = vmatprep.subr.mxu0 0.0
        %931 = vmatpush1.msra.mxu0 0.0
        %932 = vmatprep.subr.mxu0 0.0
        %933 = vmatpush1.msra.mxu0 0.0
        %934 = vmatprep.subr.mxu0 0.0
        %935 = vmatpush1.msra.mxu0 0.0
        %936 = vmatprep.subr.mxu0 0.0
        %937 = vmatpush1.msra.mxu0 0.0
        %938 = vmatprep.subr.mxu0 0.0
        %939 = vmatpush1.msra.mxu0 0.0
        %940 = vmatprep.subr.mxu0 0.0
        %941 = vmatpush1.msra.mxu0 0.0
        %942 = vmatprep.subr.mxu0 0.0
        %943 = vmatpush1.msra.mxu0 0.0
        %944 = vmatprep.subr.mxu0 0.0
        %945 = vmatpush1.msra.mxu0 0.0
        %946 = vmatprep.subr.mxu0 0.0
        %947 = vmatpush1.msra.mxu0 0.0
        %948 = vmatprep.mubr.f32.mxu0 0.0
        %949 = vmatmul.mubr.f32.gmra.mrb[0].mxu0 %v882
        %v950 = vpop.f32.mrb[0].mxu0
        %v951 = vadd.f32 %v877, %v950
        %v952 = vpop.f32.mrb[0].mxu0
        %953 = vdwg.mxu0
        %v954 = vadd.f32 %v951, %v423
        %vm955 = vcmp.gt.f32.partialorder %v954, 0.0
        %v956 = vmul.f32 %v954, 0.01
        %v957 = vsel %vm955, %v954, %v956
        %v958 = vld [vmem:[#allocation10] sm:$0xff]
        %v959 = vld [vmem:[#allocation10 + $0x8] sm:$0xff]
        %v960 = vld [vmem:[#allocation10 + $0x10] sm:$0xff]
        %v961 = vld [vmem:[#allocation10 + $0x18] sm:$0xff]
        %v962 = vld [vmem:[#allocation10 + $0x20] sm:$0xff]
        %v963 = vld [vmem:[#allocation10 + $0x28] sm:$0xff]
        %v964 = vld [vmem:[#allocation10 + $0x30] sm:$0xff]
        %v965 = vld [vmem:[#allocation10 + $0x38] sm:$0xff]
        %v966 = vld [vmem:[#allocation10 + $0x40] sm:$0xff]
        %v967 = vld [vmem:[#allocation10 + $0x48] sm:$0xff]
        %v968 = vld [vmem:[#allocation10 + $0x50] sm:$0xff]
        %v969 = vld [vmem:[#allocation10 + $0x58] sm:$0xff]
        %v970 = vld [vmem:[#allocation10 + $0x60] sm:$0xff]
        %v971 = vld [vmem:[#allocation10 + $0x68] sm:$0xff]
        %v972 = vld [vmem:[#allocation10 + $0x70] sm:$0xff]
        %v973 = vld [vmem:[#allocation10 + $0x78] sm:$0xff]
        %974 = vmatprep.subr.mxu0 0.0
        %975 = vmatpush1.msra.mxu0 %v958
        %976 = vmatprep.subr.mxu0 0.0
        %977 = vmatpush1.msra.mxu0 %v959
        %978 = vmatprep.subr.mxu0 0.0
        %979 = vmatpush1.msra.mxu0 %v960
        %980 = vmatprep.subr.mxu0 0.0
        %981 = vmatpush1.msra.mxu0 %v961
        %982 = vmatprep.subr.mxu0 0.0
        %983 = vmatpush1.msra.mxu0 %v962
        %984 = vmatprep.subr.mxu0 0.0
        %985 = vmatpush1.msra.mxu0 %v963
        %986 = vmatprep.subr.mxu0 0.0
        %987 = vmatpush1.msra.mxu0 %v964
        %988 = vmatprep.subr.mxu0 0.0
        %989 = vmatpush1.msra.mxu0 %v965
        %990 = vmatprep.subr.mxu0 0.0
        %991 = vmatpush1.msra.mxu0 %v966
        %992 = vmatprep.subr.mxu0 0.0
        %993 = vmatpush1.msra.mxu0 %v967
        %994 = vmatprep.subr.mxu0 0.0
        %995 = vmatpush1.msra.mxu0 %v968
        %996 = vmatprep.subr.mxu0 0.0
        %997 = vmatpush1.msra.mxu0 %v969
        %998 = vmatprep.subr.mxu0 0.0
        %999 = vmatpush1.msra.mxu0 %v970
        %1000 = vmatprep.subr.mxu0 0.0
        %1001 = vmatpush1.msra.mxu0 %v971
        %1002 = vmatprep.subr.mxu0 0.0
        %1003 = vmatpush1.msra.mxu0 %v972
        %1004 = vmatprep.subr.mxu0 0.0
        %1005 = vmatpush1.msra.mxu0 %v973
        %1006 = vmatprep.subr.mxu0 0.0
        %1007 = vmatpush1.msra.mxu0 0.0
        %1008 = vmatprep.subr.mxu0 0.0
        %1009 = vmatpush1.msra.mxu0 0.0
        %1010 = vmatprep.subr.mxu0 0.0
        %1011 = vmatpush1.msra.mxu0 0.0
        %1012 = vmatprep.subr.mxu0 0.0
        %1013 = vmatpush1.msra.mxu0 0.0
        %1014 = vmatprep.subr.mxu0 0.0
        %1015 = vmatpush1.msra.mxu0 0.0
        %1016 = vmatprep.subr.mxu0 0.0
        %1017 = vmatpush1.msra.mxu0 0.0
        %1018 = vmatprep.subr.mxu0 0.0
        %1019 = vmatpush1.msra.mxu0 0.0
        %1020 = vmatprep.subr.mxu0 0.0
        %1021 = vmatpush1.msra.mxu0 0.0
        %1022 = vmatprep.subr.mxu0 0.0
        %1023 = vmatpush1.msra.mxu0 0.0
        %1024 = vmatprep.subr.mxu0 0.0
        %1025 = vmatpush1.msra.mxu0 0.0
        %1026 = vmatprep.subr.mxu0 0.0
        %1027 = vmatpush1.msra.mxu0 0.0
        %1028 = vmatprep.subr.mxu0 0.0
        %1029 = vmatpush1.msra.mxu0 0.0
        %1030 = vmatprep.subr.mxu0 0.0
        %1031 = vmatpush1.msra.mxu0 0.0
        %1032 = vmatprep.subr.mxu0 0.0
        %1033 = vmatpush1.msra.mxu0 0.0
        %1034 = vmatprep.subr.mxu0 0.0
        %1035 = vmatpush1.msra.mxu0 0.0
        %1036 = vmatprep.subr.mxu0 0.0
        %1037 = vmatpush1.msra.mxu0 0.0
        %1038 = vmatprep.mubr.f32.mxu0 0.0
        %1039 = vmatmul.mubr.f32.gmra.mrb[0].mxu0 %v957
        %v1040 = vpop.f32.mrb[0].mxu0
        %v1041 = vadd.f32 %v424, %v1040
        %v1042 = vpop.f32.mrb[0].mxu0
        %1043 = vdwg.mxu0
        %v1044 = vand.u32 2147483647, %v1041
        %v1045 = vsub.f32 0.0, %v1044
        %v1046 = vmul.f32 %v1045, 1.442695
        %v1047 = vpow.pop %v1046
        %vm1048 = vcmp.ge.f32.partialorder %v1041, 0.0
        %v1049 = vadd.f32 %v1047, 1.0
        %v1050 = vrcp.pop %v1049
        %v1051 = vmul.f32 1.0, %v1050
        %v1052 = vmul.f32 %v1047, %v1050
        %v1053 = vsel %vm1048, %v1051, %v1052
        %v1054 = vlaneseq
        %v1055 = vshrl.u32 %v1054, 7
        %v1056 = vsub.s32 0, %v1055
        %v1057 = vrot.slane %v1053, %v1056
        %1058 = vst [vmem:[%s415] sm:$0xff] %v1057
        %s1059 = sand.u32 %s235, 1
        %s1060 = scalar_lea.sflag [#allocation4], %s1059
        %s1061 = sand.u32 %s235, 1
        %s1062 = smul.addr %s1061, 8
        %s1063 = scalar_lea.vmem [#allocation11], %s1062
        // Predicated region
        $region77: #{tpu_custom_call.1} parent=55 // pred_check
          %p1064 = pneg %p245
        $region78: #{tpu_custom_call.1} parent=55 // pred_check_branch
          %1066 = sbr.rel (%p1064) target = $region80
        $region79: #{tpu_custom_call.1} parent=55 // pred_region
          %s1068 = ssub.s32 128, 128
          %1069 = vsyncadd %s1060, %s1068
          %s1070 = smul.addr %s28, 128
          %s1071 = scalar_lea.hbm %s9, %s1070
          %s1073 = sshll.u32 %s1063, 4
          %s1074 = int_to_ptr.vmem [resolvable:$true] %s1073
          %1076 = dma.vmem_to_hbm [thread:$0]  %s1074, 128, %s1071, %s1060
        $region80: #{tpu_custom_call.1} parent=55 // pred_fallthru
          _
      $region56: #{tpu_custom_call.1} parent=5 // pred_fallthru
        _
      %p1077 = scmp.le.s32.totalorder 2, %s23
      // Predicated region
      $region81: #{tpu_custom_call.1} parent=5 // pred_check
        %p1078 = pneg %p1077
      $region82: #{tpu_custom_call.1} parent=5 // pred_check_branch
        %1080 = sbr.rel (%p1078) target = $region84
      $region83: #{tpu_custom_call.1} parent=5 // pred_region
        %s1081 = ssub.s32 %s23, 2
        // Predicated region
        $region85: #{tpu_custom_call.1} parent=83 // pred_check
          %p1082 = pneg %p251
        $region86: #{tpu_custom_call.1} parent=83 // pred_check_branch
          %1084 = sbr.rel (%p1082) target = $region88
        $region87: #{tpu_custom_call.1} parent=83 // pred_region
          %s1085 = sand.u32 %s236, 1
          %s1086 = scalar_lea.sflag [#allocation4], %s1085
          %s1087 = sand.u32 %s236, 1
          %s1088 = smul.addr %s1087, 8
          %s1089 = scalar_lea.vmem [#allocation11], %s1088
          %1090 = dma.done %s1086, 128
        $region88: #{tpu_custom_call.1} parent=83 // pred_fallthru
          _
      $region84: #{tpu_custom_call.1} parent=5 // pred_fallthru
        _
    $region6: #{tpu_custom_call.1} parent=1 // loop_footer
      %s27 = sadd.s32 1, %s23
    $region7: #{tpu_custom_call.1} parent=1 // loop_footer_branch
      %22 = sbr.rel target = $region3
    $region8: #{tpu_custom_call.1} parent=1 // loop_exit
      _
    %1091 = vsyncpa [#allocation3], 1
    %s1092 = scalar_lea.sflag [#allocation3], 1
    %1093 = vsyncpa %s1092, 1
    %1094 = vsyncpa [#allocation6], 1
    %1095 = vsyncpa [#allocation9], 1
    %1096 = vsyncpa [#allocation4], 1
    %s1097 = scalar_lea.sflag [#allocation4], 1
    %1098 = vsyncpa %s1097, 1

</llo_original>
